<compile_context>
chip_gen: v5e
topology: v5e:2x2
jax: 0.10.0
libtpu: 0.0.40
codegen_flags: <defaults>
</compile_context>

<pallas_src>
import functools

import jax
import jax.numpy as jnp
from jax.experimental import pallas as pl
from jax.experimental.pallas import tpu as pltpu

O_PAD = 128  # lane-dense FC output width; sliced back to the true O outside the kernel


def lstm_fc_kernel(x_ref, w_ih_ref, w_hh_ref, b_ref, w_fc_ref, b_fc_ref, out_ref,
                   *, T, B):
    """Whole-sequence LSTM + fused FC/sigmoid head, single kernel invocation.

    x_ref:    (T*B, D)   time-major, batch-padded, pre-flattened input
    w_ih_ref: (D, 4H)    input->gates weight (transposed, gate order [i,f,g,o])
    w_hh_ref: (H, 4H)    hidden->gates weight (transposed)
    b_ref:    (1, 4H)    combined bias b_ih + b_hh
    w_fc_ref: (H, 128)   fc weight, zero-padded to lane-dense 128 columns
    b_fc_ref: (1, 128)   fc bias, zero-padded
    out_ref:  (B, 128)   sigmoid(fc(h_T)), lane-dense (sliced to true O outside)
    """
    H = w_hh_ref.shape[0]

    # ---- Phase 1 (no sequential dependence): hoisted input projection -------------
    # One dense (T*B, D) @ (D, 4H) matmul + bias; result stays in registers.
    gx = (jnp.dot(x_ref[...], w_ih_ref[...], preferred_element_type=jnp.float32)
          + b_ref[...])                                   # (T*B, 4H)

    w_hh = w_hh_ref[...]                                  # (H, 4H), vreg-resident

    # ---- Phase 2: the recurrence. h/c live in registers; static T -> full unroll. --
    h = jnp.zeros((B, H), jnp.float32)
    c = jnp.zeros((B, H), jnp.float32)
    for t in range(T):                                    # static slices of gx
        gates = (gx[t * B:(t + 1) * B, :]
                 + jnp.dot(h, w_hh, preferred_element_type=jnp.float32))
        i_g = jax.nn.sigmoid(gates[:, 0 * H:1 * H])
        f_g = jax.nn.sigmoid(gates[:, 1 * H:2 * H])
        g_g = jnp.tanh(gates[:, 2 * H:3 * H])
        o_g = jax.nn.sigmoid(gates[:, 3 * H:4 * H])
        c = f_g * c + i_g * g_g
        h = o_g * jnp.tanh(c)

    # ---- Phase 3: fused head, lane-dense unmasked (8,128) output store. ------------
    logits = (jnp.dot(h, w_fc_ref[...], preferred_element_type=jnp.float32)
              + b_fc_ref[...])
    out_ref[...] = jax.nn.sigmoid(logits).astype(out_ref.dtype)


def prepare_lstm_params(w_ih, w_hh, b_ih, b_hh, w_fc, b_fc):
    """One-time layout plumbing: transpose / pad weights so the kernel does pure
    matmul + elementwise.  Call once at model-setup time, not per forward."""
    H = w_hh.shape[1]
    O = w_fc.shape[0]
    w_ih_t = jnp.transpose(w_ih).astype(jnp.float32)                      # (D, 4H)
    w_hh_t = jnp.transpose(w_hh).astype(jnp.float32)                      # (H, 4H)
    bias = (b_ih + b_hh).astype(jnp.float32)[None, :]                     # (1, 4H)
    w_fc_t = jnp.zeros((H, O_PAD), jnp.float32).at[:, :O].set(jnp.transpose(w_fc))
    b_fc_p = jnp.zeros((1, O_PAD), jnp.float32).at[:, :O].set(b_fc)
    return dict(w_ih_t=w_ih_t, w_hh_t=w_hh_t, bias=bias,
                w_fc_t=w_fc_t, b_fc_p=b_fc_p, out_dim=O)


def lstm_model_forward(x, params):
    """x: (B, T, D) float32, batch_first like the PyTorch module."""
    B, T, D = x.shape
    H = params["w_hh_t"].shape[0]
    O = params["out_dim"]
    B_PAD = max(8, ((B + 7) // 8) * 8)   # full 8-sublane vregs / unmasked stores

    # Wrapper-side layout plumbing (free XLA ops): time-major, batch-pad, flatten.
    x_tm = jnp.transpose(x, (1, 0, 2))                         # (T, B, D)
    x_tm = jnp.pad(x_tm, ((0, 0), (0, B_PAD - B), (0, 0)))     # (T, B_PAD, D)
    x_flat = x_tm.reshape(T * B_PAD, D)                        # (T*B_PAD, D)

    # Advisory cost estimate (per-call): matmul flops + EUP transcendentals + bytes.
    flops = (2 * T * B_PAD * D * 4 * H            # input projection
             + 2 * T * B_PAD * H * 4 * H          # recurrence matmuls
             + 2 * B_PAD * H * O_PAD)             # fc head
    transcendentals = T * B_PAD * (4 * H + H) + B_PAD * O_PAD
    bytes_accessed = 4 * (T * B_PAD * D + D * 4 * H + H * 4 * H + 4 * H
                          + H * O_PAD + O_PAD + B_PAD * O_PAD)
    # Explicit VMEM budget with generous headroom (keeps v7x's 64 MiB happy).
    vmem_limit = min(4 * bytes_accessed + (8 << 20), 64 << 20)

    vmem = pl.BlockSpec(memory_space=pltpu.MemorySpace.VMEM)
    kernel = functools.partial(lstm_fc_kernel, T=T, B=B_PAD)
    out_pad = pl.pallas_call(
        kernel,
        out_shape=jax.ShapeDtypeStruct((B_PAD, O_PAD), jnp.float32),
        in_specs=[vmem] * 6,          # full arrays VMEM-resident, single invocation
        out_specs=vmem,
        compiler_params=pltpu.CompilerParams(vmem_limit_bytes=vmem_limit),
        cost_estimate=pl.CostEstimate(flops=flops,
                                      transcendentals=transcendentals,
                                      bytes_accessed=bytes_accessed),
    )(x_flat, params["w_ih_t"], params["w_hh_t"], params["bias"],
      params["w_fc_t"], params["b_fc_p"])

    return out_pad[:B, :O]


def lstm_model_reference(x, w_ih, w_hh, b_ih, b_hh, w_fc, b_fc):
    """Pure-JAX reference replicating nn.LSTM (batch_first) + Linear + Sigmoid."""
    B, T, D = x.shape
    H = w_hh.shape[1]
    h = jnp.zeros((B, H), jnp.float32)
    c = jnp.zeros((B, H), jnp.float32)

    def step(carry, x_t):
        h, c = carry
        gates = x_t @ w_ih.T + h @ w_hh.T + b_ih + b_hh
        i = jax.nn.sigmoid(gates[:, 0 * H:1 * H])
        f = jax.nn.sigmoid(gates[:, 1 * H:2 * H])
        g = jnp.tanh(gates[:, 2 * H:3 * H])
        o = jax.nn.sigmoid(gates[:, 3 * H:4 * H])
        c = f * c + i * g
        h = o * jnp.tanh(c)
        return (h, c), None

    (h, c), _ = jax.lax.scan(step, (h, c), jnp.transpose(x, (1, 0, 2)))
    return jax.nn.sigmoid(h @ w_fc.T + b_fc)


if __name__ == "__main__":
    # Small shapes consistent with the module (LSTM -> last-step FC -> sigmoid):
    B, T, D, H, O = 2, 8, 16, 32, 5

    key = jax.random.PRNGKey(0)
    ks = jax.random.split(key, 7)
    bound = 1.0 / jnp.sqrt(H)   # PyTorch default uniform init range

    x = jax.random.normal(ks[0], (B, T, D), dtype=jnp.float32)
    w_ih = jax.random.uniform(ks[1], (4 * H, D), minval=-bound, maxval=bound, dtype=jnp.float32)
    w_hh = jax.random.uniform(ks[2], (4 * H, H), minval=-bound, maxval=bound, dtype=jnp.float32)
    b_ih = jax.random.uniform(ks[3], (4 * H,), minval=-bound, maxval=bound, dtype=jnp.float32)
    b_hh = jax.random.uniform(ks[4], (4 * H,), minval=-bound, maxval=bound, dtype=jnp.float32)
    w_fc = jax.random.uniform(ks[5], (O, H), minval=-bound, maxval=bound, dtype=jnp.float32)
    b_fc = jax.random.uniform(ks[6], (O,), minval=-bound, maxval=bound, dtype=jnp.float32)

    params = prepare_lstm_params(w_ih, w_hh, b_ih, b_hh, w_fc, b_fc)   # one-time setup
    out = lstm_model_forward(x, params)
    out = jax.block_until_ready(out)

    ref = jax.block_until_ready(
        lstm_model_reference(x, w_ih, w_hh, b_ih, b_hh, w_fc, b_fc))
    assert out.shape == (B, O)
    assert jnp.max(jnp.abs(out - ref)) < 2e-5, "mismatch vs pure-JAX reference"

    print("KERNEL_OK")
</pallas_src>

<mosaic_0001>
module attributes {stable_mosaic.version = 11 : i64} {
  func.func @lstm_fc_kernel(%arg0: memref<64x16xf32, #tpu.memory_space<vmem>>, %arg1: memref<16x128xf32, #tpu.memory_space<vmem>>, %arg2: memref<32x128xf32, #tpu.memory_space<vmem>>, %arg3: memref<1x128xf32, #tpu.memory_space<vmem>>, %arg4: memref<32x128xf32, #tpu.memory_space<vmem>>, %arg5: memref<1x128xf32, #tpu.memory_space<vmem>>, %arg6: memref<8x128xf32, #tpu.memory_space<vmem>>) attributes {dimension_semantics = [], scalar_prefetch = 0 : i64, scratch_operands = 0 : i64, tpu.core_type = #tpu.core_type<tc>} {
    %c0 = arith.constant 0 : index
    %c0_0 = arith.constant 0 : index
    %0 = vector.load %arg0[%c0, %c0_0] : memref<64x16xf32, #tpu.memory_space<vmem>>, vector<64x16xf32>
    %c0_1 = arith.constant 0 : index
    %c0_2 = arith.constant 0 : index
    %1 = vector.load %arg1[%c0_1, %c0_2] : memref<16x128xf32, #tpu.memory_space<vmem>>, vector<16x128xf32>
    %cst = arith.constant dense<0.000000e+00> : vector<64x128xf32>
    %2 = tpu.matmul %0, %1, %cst {dimension_numbers = #tpu.dot_dimension_numbers<[1], [0], [0], [1], [0, 0, 1, 1], [], []>} : vector<64x16xf32>, vector<16x128xf32>, vector<64x128xf32> -> vector<64x128xf32>
    %c0_3 = arith.constant 0 : index
    %c0_4 = arith.constant 0 : index
    %3 = vector.load %arg3[%c0_3, %c0_4] : memref<1x128xf32, #tpu.memory_space<vmem>>, vector<1x128xf32>
    %4 = vector.broadcast %3 : vector<1x128xf32> to vector<64x128xf32>
    %5 = arith.addf %2, %4 : vector<64x128xf32>
    %c0_5 = arith.constant 0 : index
    %c0_6 = arith.constant 0 : index
    %6 = vector.load %arg2[%c0_5, %c0_6] : memref<32x128xf32, #tpu.memory_space<vmem>>, vector<32x128xf32>
    %cst_7 = arith.constant 0.000000e+00 : f32
    %7 = vector.broadcast %cst_7 : f32 to vector<8x32xf32>
    %cst_8 = arith.constant 0.000000e+00 : f32
    %8 = vector.broadcast %cst_8 : f32 to vector<8x32xf32>
    %9 = vector.extract_strided_slice %5 {offsets = [0, 0], sizes = [8, 128], strides = [1, 1]} : vector<64x128xf32> to vector<8x128xf32>
    %cst_9 = arith.constant dense<0.000000e+00> : vector<8x128xf32>
    %10 = tpu.matmul %7, %6, %cst_9 {dimension_numbers = #tpu.dot_dimension_numbers<[1], [0], [0], [1], [0, 0, 1, 1], [], []>} : vector<8x32xf32>, vector<32x128xf32>, vector<8x128xf32> -> vector<8x128xf32>
    %11 = arith.addf %9, %10 : vector<8x128xf32>
    %12 = vector.extract_strided_slice %11 {offsets = [0, 0], sizes = [8, 32], strides = [1, 1]} : vector<8x128xf32> to vector<8x32xf32>
    %13 = arith.negf %12 : vector<8x32xf32>
    %14 = math.exp %13 : vector<8x32xf32>
    %cst_10 = arith.constant 1.000000e+00 : f32
    %15 = vector.broadcast %cst_10 : f32 to vector<8x32xf32>
    %16 = arith.addf %15, %14 : vector<8x32xf32>
    %17 = arith.divf %15, %16 : vector<8x32xf32>
    %18 = vector.extract_strided_slice %11 {offsets = [0, 32], sizes = [8, 32], strides = [1, 1]} : vector<8x128xf32> to vector<8x32xf32>
    %19 = arith.negf %18 : vector<8x32xf32>
    %20 = math.exp %19 : vector<8x32xf32>
    %cst_11 = arith.constant 1.000000e+00 : f32
    %21 = vector.broadcast %cst_11 : f32 to vector<8x32xf32>
    %22 = arith.addf %21, %20 : vector<8x32xf32>
    %23 = arith.divf %21, %22 : vector<8x32xf32>
    %24 = vector.extract_strided_slice %11 {offsets = [0, 64], sizes = [8, 32], strides = [1, 1]} : vector<8x128xf32> to vector<8x32xf32>
    %25 = math.tanh %24 : vector<8x32xf32>
    %26 = vector.extract_strided_slice %11 {offsets = [0, 96], sizes = [8, 32], strides = [1, 1]} : vector<8x128xf32> to vector<8x32xf32>
    %27 = arith.negf %26 : vector<8x32xf32>
    %28 = math.exp %27 : vector<8x32xf32>
    %cst_12 = arith.constant 1.000000e+00 : f32
    %29 = vector.broadcast %cst_12 : f32 to vector<8x32xf32>
    %30 = arith.addf %29, %28 : vector<8x32xf32>
    %31 = arith.divf %29, %30 : vector<8x32xf32>
    %32 = arith.mulf %23, %8 : vector<8x32xf32>
    %33 = arith.mulf %17, %25 : vector<8x32xf32>
    %34 = arith.addf %32, %33 : vector<8x32xf32>
    %35 = math.tanh %34 : vector<8x32xf32>
    %36 = arith.mulf %31, %35 : vector<8x32xf32>
    %37 = vector.extract_strided_slice %5 {offsets = [8, 0], sizes = [8, 128], strides = [1, 1]} : vector<64x128xf32> to vector<8x128xf32>
    %cst_13 = arith.constant dense<0.000000e+00> : vector<8x128xf32>
    %38 = tpu.matmul %36, %6, %cst_13 {dimension_numbers = #tpu.dot_dimension_numbers<[1], [0], [0], [1], [0, 0, 1, 1], [], []>} : vector<8x32xf32>, vector<32x128xf32>, vector<8x128xf32> -> vector<8x128xf32>
    %39 = arith.addf %37, %38 : vector<8x128xf32>
    %40 = vector.extract_strided_slice %39 {offsets = [0, 0], sizes = [8, 32], strides = [1, 1]} : vector<8x128xf32> to vector<8x32xf32>
    %41 = arith.negf %40 : vector<8x32xf32>
    %42 = math.exp %41 : vector<8x32xf32>
    %cst_14 = arith.constant 1.000000e+00 : f32
    %43 = vector.broadcast %cst_14 : f32 to vector<8x32xf32>
    %44 = arith.addf %43, %42 : vector<8x32xf32>
    %45 = arith.divf %43, %44 : vector<8x32xf32>
    %46 = vector.extract_strided_slice %39 {offsets = [0, 32], sizes = [8, 32], strides = [1, 1]} : vector<8x128xf32> to vector<8x32xf32>
    %47 = arith.negf %46 : vector<8x32xf32>
    %48 = math.exp %47 : vector<8x32xf32>
    %cst_15 = arith.constant 1.000000e+00 : f32
    %49 = vector.broadcast %cst_15 : f32 to vector<8x32xf32>
    %50 = arith.addf %49, %48 : vector<8x32xf32>
    %51 = arith.divf %49, %50 : vector<8x32xf32>
    %52 = vector.extract_strided_slice %39 {offsets = [0, 64], sizes = [8, 32], strides = [1, 1]} : vector<8x128xf32> to vector<8x32xf32>
    %53 = math.tanh %52 : vector<8x32xf32>
    %54 = vector.extract_strided_slice %39 {offsets = [0, 96], sizes = [8, 32], strides = [1, 1]} : vector<8x128xf32> to vector<8x32xf32>
    %55 = arith.negf %54 : vector<8x32xf32>
    %56 = math.exp %55 : vector<8x32xf32>
    %cst_16 = arith.constant 1.000000e+00 : f32
    %57 = vector.broadcast %cst_16 : f32 to vector<8x32xf32>
    %58 = arith.addf %57, %56 : vector<8x32xf32>
    %59 = arith.divf %57, %58 : vector<8x32xf32>
    %60 = arith.mulf %51, %34 : vector<8x32xf32>
    %61 = arith.mulf %45, %53 : vector<8x32xf32>
    %62 = arith.addf %60, %61 : vector<8x32xf32>
    %63 = math.tanh %62 : vector<8x32xf32>
    %64 = arith.mulf %59, %63 : vector<8x32xf32>
    %65 = vector.extract_strided_slice %5 {offsets = [16, 0], sizes = [8, 128], strides = [1, 1]} : vector<64x128xf32> to vector<8x128xf32>
    %cst_17 = arith.constant dense<0.000000e+00> : vector<8x128xf32>
    %66 = tpu.matmul %64, %6, %cst_17 {dimension_numbers = #tpu.dot_dimension_numbers<[1], [0], [0], [1], [0, 0, 1, 1], [], []>} : vector<8x32xf32>, vector<32x128xf32>, vector<8x128xf32> -> vector<8x128xf32>
    %67 = arith.addf %65, %66 : vector<8x128xf32>
    %68 = vector.extract_strided_slice %67 {offsets = [0, 0], sizes = [8, 32], strides = [1, 1]} : vector<8x128xf32> to vector<8x32xf32>
    %69 = arith.negf %68 : vector<8x32xf32>
    %70 = math.exp %69 : vector<8x32xf32>
    %cst_18 = arith.constant 1.000000e+00 : f32
    %71 = vector.broadcast %cst_18 : f32 to vector<8x32xf32>
    %72 = arith.addf %71, %70 : vector<8x32xf32>
    %73 = arith.divf %71, %72 : vector<8x32xf32>
    %74 = vector.extract_strided_slice %67 {offsets = [0, 32], sizes = [8, 32], strides = [1, 1]} : vector<8x128xf32> to vector<8x32xf32>
    %75 = arith.negf %74 : vector<8x32xf32>
    %76 = math.exp %75 : vector<8x32xf32>
    %cst_19 = arith.constant 1.000000e+00 : f32
    %77 = vector.broadcast %cst_19 : f32 to vector<8x32xf32>
    %78 = arith.addf %77, %76 : vector<8x32xf32>
    %79 = arith.divf %77, %78 : vector<8x32xf32>
    %80 = vector.extract_strided_slice %67 {offsets = [0, 64], sizes = [8, 32], strides = [1, 1]} : vector<8x128xf32> to vector<8x32xf32>
    %81 = math.tanh %80 : vector<8x32xf32>
    %82 = vector.extract_strided_slice %67 {offsets = [0, 96], sizes = [8, 32], strides = [1, 1]} : vector<8x128xf32> to vector<8x32xf32>
    %83 = arith.negf %82 : vector<8x32xf32>
    %84 = math.exp %83 : vector<8x32xf32>
    %cst_20 = arith.constant 1.000000e+00 : f32
    %85 = vector.broadcast %cst_20 : f32 to vector<8x32xf32>
    %86 = arith.addf %85, %84 : vector<8x32xf32>
    %87 = arith.divf %85, %86 : vector<8x32xf32>
    %88 = arith.mulf %79, %62 : vector<8x32xf32>
    %89 = arith.mulf %73, %81 : vector<8x32xf32>
    %90 = arith.addf %88, %89 : vector<8x32xf32>
    %91 = math.tanh %90 : vector<8x32xf32>
    %92 = arith.mulf %87, %91 : vector<8x32xf32>
    %93 = vector.extract_strided_slice %5 {offsets = [24, 0], sizes = [8, 128], strides = [1, 1]} : vector<64x128xf32> to vector<8x128xf32>
    %cst_21 = arith.constant dense<0.000000e+00> : vector<8x128xf32>
    %94 = tpu.matmul %92, %6, %cst_21 {dimension_numbers = #tpu.dot_dimension_numbers<[1], [0], [0], [1], [0, 0, 1, 1], [], []>} : vector<8x32xf32>, vector<32x128xf32>, vector<8x128xf32> -> vector<8x128xf32>
    %95 = arith.addf %93, %94 : vector<8x128xf32>
    %96 = vector.extract_strided_slice %95 {offsets = [0, 0], sizes = [8, 32], strides = [1, 1]} : vector<8x128xf32> to vector<8x32xf32>
    %97 = arith.negf %96 : vector<8x32xf32>
    %98 = math.exp %97 : vector<8x32xf32>
    %cst_22 = arith.constant 1.000000e+00 : f32
    %99 = vector.broadcast %cst_22 : f32 to vector<8x32xf32>
    %100 = arith.addf %99, %98 : vector<8x32xf32>
    %101 = arith.divf %99, %100 : vector<8x32xf32>
    %102 = vector.extract_strided_slice %95 {offsets = [0, 32], sizes = [8, 32], strides = [1, 1]} : vector<8x128xf32> to vector<8x32xf32>
    %103 = arith.negf %102 : vector<8x32xf32>
    %104 = math.exp %103 : vector<8x32xf32>
    %cst_23 = arith.constant 1.000000e+00 : f32
    %105 = vector.broadcast %cst_23 : f32 to vector<8x32xf32>
    %106 = arith.addf %105, %104 : vector<8x32xf32>
    %107 = arith.divf %105, %106 : vector<8x32xf32>
    %108 = vector.extract_strided_slice %95 {offsets = [0, 64], sizes = [8, 32], strides = [1, 1]} : vector<8x128xf32> to vector<8x32xf32>
    %109 = math.tanh %108 : vector<8x32xf32>
    %110 = vector.extract_strided_slice %95 {offsets = [0, 96], sizes = [8, 32], strides = [1, 1]} : vector<8x128xf32> to vector<8x32xf32>
    %111 = arith.negf %110 : vector<8x32xf32>
    %112 = math.exp %111 : vector<8x32xf32>
    %cst_24 = arith.constant 1.000000e+00 : f32
    %113 = vector.broadcast %cst_24 : f32 to vector<8x32xf32>
    %114 = arith.addf %113, %112 : vector<8x32xf32>
    %115 = arith.divf %113, %114 : vector<8x32xf32>
    %116 = arith.mulf %107, %90 : vector<8x32xf32>
    %117 = arith.mulf %101, %109 : vector<8x32xf32>
    %118 = arith.addf %116, %117 : vector<8x32xf32>
    %119 = math.tanh %118 : vector<8x32xf32>
    %120 = arith.mulf %115, %119 : vector<8x32xf32>
    %121 = vector.extract_strided_slice %5 {offsets = [32, 0], sizes = [8, 128], strides = [1, 1]} : vector<64x128xf32> to vector<8x128xf32>
    %cst_25 = arith.constant dense<0.000000e+00> : vector<8x128xf32>
    %122 = tpu.matmul %120, %6, %cst_25 {dimension_numbers = #tpu.dot_dimension_numbers<[1], [0], [0], [1], [0, 0, 1, 1], [], []>} : vector<8x32xf32>, vector<32x128xf32>, vector<8x128xf32> -> vector<8x128xf32>
    %123 = arith.addf %121, %122 : vector<8x128xf32>
    %124 = vector.extract_strided_slice %123 {offsets = [0, 0], sizes = [8, 32], strides = [1, 1]} : vector<8x128xf32> to vector<8x32xf32>
    %125 = arith.negf %124 : vector<8x32xf32>
    %126 = math.exp %125 : vector<8x32xf32>
    %cst_26 = arith.constant 1.000000e+00 : f32
    %127 = vector.broadcast %cst_26 : f32 to vector<8x32xf32>
    %128 = arith.addf %127, %126 : vector<8x32xf32>
    %129 = arith.divf %127, %128 : vector<8x32xf32>
    %130 = vector.extract_strided_slice %123 {offsets = [0, 32], sizes = [8, 32], strides = [1, 1]} : vector<8x128xf32> to vector<8x32xf32>
    %131 = arith.negf %130 : vector<8x32xf32>
    %132 = math.exp %131 : vector<8x32xf32>
    %cst_27 = arith.constant 1.000000e+00 : f32
    %133 = vector.broadcast %cst_27 : f32 to vector<8x32xf32>
    %134 = arith.addf %133, %132 : vector<8x32xf32>
    %135 = arith.divf %133, %134 : vector<8x32xf32>
    %136 = vector.extract_strided_slice %123 {offsets = [0, 64], sizes = [8, 32], strides = [1, 1]} : vector<8x128xf32> to vector<8x32xf32>
    %137 = math.tanh %136 : vector<8x32xf32>
    %138 = vector.extract_strided_slice %123 {offsets = [0, 96], sizes = [8, 32], strides = [1, 1]} : vector<8x128xf32> to vector<8x32xf32>
    %139 = arith.negf %138 : vector<8x32xf32>
    %140 = math.exp %139 : vector<8x32xf32>
    %cst_28 = arith.constant 1.000000e+00 : f32
    %141 = vector.broadcast %cst_28 : f32 to vector<8x32xf32>
    %142 = arith.addf %141, %140 : vector<8x32xf32>
    %143 = arith.divf %141, %142 : vector<8x32xf32>
    %144 = arith.mulf %135, %118 : vector<8x32xf32>
    %145 = arith.mulf %129, %137 : vector<8x32xf32>
    %146 = arith.addf %144, %145 : vector<8x32xf32>
    %147 = math.tanh %146 : vector<8x32xf32>
    %148 = arith.mulf %143, %147 : vector<8x32xf32>
    %149 = vector.extract_strided_slice %5 {offsets = [40, 0], sizes = [8, 128], strides = [1, 1]} : vector<64x128xf32> to vector<8x128xf32>
    %cst_29 = arith.constant dense<0.000000e+00> : vector<8x128xf32>
    %150 = tpu.matmul %148, %6, %cst_29 {dimension_numbers = #tpu.dot_dimension_numbers<[1], [0], [0], [1], [0, 0, 1, 1], [], []>} : vector<8x32xf32>, vector<32x128xf32>, vector<8x128xf32> -> vector<8x128xf32>
    %151 = arith.addf %149, %150 : vector<8x128xf32>
    %152 = vector.extract_strided_slice %151 {offsets = [0, 0], sizes = [8, 32], strides = [1, 1]} : vector<8x128xf32> to vector<8x32xf32>
    %153 = arith.negf %152 : vector<8x32xf32>
    %154 = math.exp %153 : vector<8x32xf32>
    %cst_30 = arith.constant 1.000000e+00 : f32
    %155 = vector.broadcast %cst_30 : f32 to vector<8x32xf32>
    %156 = arith.addf %155, %154 : vector<8x32xf32>
    %157 = arith.divf %155, %156 : vector<8x32xf32>
    %158 = vector.extract_strided_slice %151 {offsets = [0, 32], sizes = [8, 32], strides = [1, 1]} : vector<8x128xf32> to vector<8x32xf32>
    %159 = arith.negf %158 : vector<8x32xf32>
    %160 = math.exp %159 : vector<8x32xf32>
    %cst_31 = arith.constant 1.000000e+00 : f32
    %161 = vector.broadcast %cst_31 : f32 to vector<8x32xf32>
    %162 = arith.addf %161, %160 : vector<8x32xf32>
    %163 = arith.divf %161, %162 : vector<8x32xf32>
    %164 = vector.extract_strided_slice %151 {offsets = [0, 64], sizes = [8, 32], strides = [1, 1]} : vector<8x128xf32> to vector<8x32xf32>
    %165 = math.tanh %164 : vector<8x32xf32>
    %166 = vector.extract_strided_slice %151 {offsets = [0, 96], sizes = [8, 32], strides = [1, 1]} : vector<8x128xf32> to vector<8x32xf32>
    %167 = arith.negf %166 : vector<8x32xf32>
    %168 = math.exp %167 : vector<8x32xf32>
    %cst_32 = arith.constant 1.000000e+00 : f32
    %169 = vector.broadcast %cst_32 : f32 to vector<8x32xf32>
    %170 = arith.addf %169, %168 : vector<8x32xf32>
    %171 = arith.divf %169, %170 : vector<8x32xf32>
    %172 = arith.mulf %163, %146 : vector<8x32xf32>
    %173 = arith.mulf %157, %165 : vector<8x32xf32>
    %174 = arith.addf %172, %173 : vector<8x32xf32>
    %175 = math.tanh %174 : vector<8x32xf32>
    %176 = arith.mulf %171, %175 : vector<8x32xf32>
    %177 = vector.extract_strided_slice %5 {offsets = [48, 0], sizes = [8, 128], strides = [1, 1]} : vector<64x128xf32> to vector<8x128xf32>
    %cst_33 = arith.constant dense<0.000000e+00> : vector<8x128xf32>
    %178 = tpu.matmul %176, %6, %cst_33 {dimension_numbers = #tpu.dot_dimension_numbers<[1], [0], [0], [1], [0, 0, 1, 1], [], []>} : vector<8x32xf32>, vector<32x128xf32>, vector<8x128xf32> -> vector<8x128xf32>
    %179 = arith.addf %177, %178 : vector<8x128xf32>
    %180 = vector.extract_strided_slice %179 {offsets = [0, 0], sizes = [8, 32], strides = [1, 1]} : vector<8x128xf32> to vector<8x32xf32>
    %181 = arith.negf %180 : vector<8x32xf32>
    %182 = math.exp %181 : vector<8x32xf32>
    %cst_34 = arith.constant 1.000000e+00 : f32
    %183 = vector.broadcast %cst_34 : f32 to vector<8x32xf32>
    %184 = arith.addf %183, %182 : vector<8x32xf32>
    %185 = arith.divf %183, %184 : vector<8x32xf32>
    %186 = vector.extract_strided_slice %179 {offsets = [0, 32], sizes = [8, 32], strides = [1, 1]} : vector<8x128xf32> to vector<8x32xf32>
    %187 = arith.negf %186 : vector<8x32xf32>
    %188 = math.exp %187 : vector<8x32xf32>
    %cst_35 = arith.constant 1.000000e+00 : f32
    %189 = vector.broadcast %cst_35 : f32 to vector<8x32xf32>
    %190 = arith.addf %189, %188 : vector<8x32xf32>
    %191 = arith.divf %189, %190 : vector<8x32xf32>
    %192 = vector.extract_strided_slice %179 {offsets = [0, 64], sizes = [8, 32], strides = [1, 1]} : vector<8x128xf32> to vector<8x32xf32>
    %193 = math.tanh %192 : vector<8x32xf32>
    %194 = vector.extract_strided_slice %179 {offsets = [0, 96], sizes = [8, 32], strides = [1, 1]} : vector<8x128xf32> to vector<8x32xf32>
    %195 = arith.negf %194 : vector<8x32xf32>
    %196 = math.exp %195 : vector<8x32xf32>
    %cst_36 = arith.constant 1.000000e+00 : f32
    %197 = vector.broadcast %cst_36 : f32 to vector<8x32xf32>
    %198 = arith.addf %197, %196 : vector<8x32xf32>
    %199 = arith.divf %197, %198 : vector<8x32xf32>
    %200 = arith.mulf %191, %174 : vector<8x32xf32>
    %201 = arith.mulf %185, %193 : vector<8x32xf32>
    %202 = arith.addf %200, %201 : vector<8x32xf32>
    %203 = math.tanh %202 : vector<8x32xf32>
    %204 = arith.mulf %199, %203 : vector<8x32xf32>
    %205 = vector.extract_strided_slice %5 {offsets = [56, 0], sizes = [8, 128], strides = [1, 1]} : vector<64x128xf32> to vector<8x128xf32>
    %cst_37 = arith.constant dense<0.000000e+00> : vector<8x128xf32>
    %206 = tpu.matmul %204, %6, %cst_37 {dimension_numbers = #tpu.dot_dimension_numbers<[1], [0], [0], [1], [0, 0, 1, 1], [], []>} : vector<8x32xf32>, vector<32x128xf32>, vector<8x128xf32> -> vector<8x128xf32>
    %207 = arith.addf %205, %206 : vector<8x128xf32>
    %208 = vector.extract_strided_slice %207 {offsets = [0, 0], sizes = [8, 32], strides = [1, 1]} : vector<8x128xf32> to vector<8x32xf32>
    %209 = arith.negf %208 : vector<8x32xf32>
    %210 = math.exp %209 : vector<8x32xf32>
    %cst_38 = arith.constant 1.000000e+00 : f32
    %211 = vector.broadcast %cst_38 : f32 to vector<8x32xf32>
    %212 = arith.addf %211, %210 : vector<8x32xf32>
    %213 = arith.divf %211, %212 : vector<8x32xf32>
    %214 = vector.extract_strided_slice %207 {offsets = [0, 32], sizes = [8, 32], strides = [1, 1]} : vector<8x128xf32> to vector<8x32xf32>
    %215 = arith.negf %214 : vector<8x32xf32>
    %216 = math.exp %215 : vector<8x32xf32>
    %cst_39 = arith.constant 1.000000e+00 : f32
    %217 = vector.broadcast %cst_39 : f32 to vector<8x32xf32>
    %218 = arith.addf %217, %216 : vector<8x32xf32>
    %219 = arith.divf %217, %218 : vector<8x32xf32>
    %220 = vector.extract_strided_slice %207 {offsets = [0, 64], sizes = [8, 32], strides = [1, 1]} : vector<8x128xf32> to vector<8x32xf32>
    %221 = math.tanh %220 : vector<8x32xf32>
    %222 = vector.extract_strided_slice %207 {offsets = [0, 96], sizes = [8, 32], strides = [1, 1]} : vector<8x128xf32> to vector<8x32xf32>
    %223 = arith.negf %222 : vector<8x32xf32>
    %224 = math.exp %223 : vector<8x32xf32>
    %cst_40 = arith.constant 1.000000e+00 : f32
    %225 = vector.broadcast %cst_40 : f32 to vector<8x32xf32>
    %226 = arith.addf %225, %224 : vector<8x32xf32>
    %227 = arith.divf %225, %226 : vector<8x32xf32>
    %228 = arith.mulf %219, %202 : vector<8x32xf32>
    %229 = arith.mulf %213, %221 : vector<8x32xf32>
    %230 = arith.addf %228, %229 : vector<8x32xf32>
    %231 = math.tanh %230 : vector<8x32xf32>
    %232 = arith.mulf %227, %231 : vector<8x32xf32>
    %c0_41 = arith.constant 0 : index
    %c0_42 = arith.constant 0 : index
    %233 = vector.load %arg4[%c0_41, %c0_42] : memref<32x128xf32, #tpu.memory_space<vmem>>, vector<32x128xf32>
    %cst_43 = arith.constant dense<0.000000e+00> : vector<8x128xf32>
    %234 = tpu.matmul %232, %233, %cst_43 {dimension_numbers = #tpu.dot_dimension_numbers<[1], [0], [0], [1], [0, 0, 1, 1], [], []>} : vector<8x32xf32>, vector<32x128xf32>, vector<8x128xf32> -> vector<8x128xf32>
    %c0_44 = arith.constant 0 : index
    %c0_45 = arith.constant 0 : index
    %235 = vector.load %arg5[%c0_44, %c0_45] : memref<1x128xf32, #tpu.memory_space<vmem>>, vector<1x128xf32>
    %236 = vector.broadcast %235 : vector<1x128xf32> to vector<8x128xf32>
    %237 = arith.addf %234, %236 : vector<8x128xf32>
    %238 = arith.negf %237 : vector<8x128xf32>
    %239 = math.exp %238 : vector<8x128xf32>
    %cst_46 = arith.constant 1.000000e+00 : f32
    %240 = vector.broadcast %cst_46 : f32 to vector<8x128xf32>
    %241 = arith.addf %240, %239 : vector<8x128xf32>
    %242 = arith.divf %240, %241 : vector<8x128xf32>
    %c0_47 = arith.constant 0 : index
    %c0_48 = arith.constant 0 : index
    %243 = vector.load %arg6[%c0_47, %c0_48] : memref<8x128xf32, #tpu.memory_space<vmem>>, vector<8x128xf32>
    tpu.vector_store %arg6[%c0_47, %c0_48], %242 {strides = array<i32>} : memref<8x128xf32, #tpu.memory_space<vmem>>, vector<8x128xf32>,
    return
  }
}

</mosaic_0001>

<llo_original>
// kernel: tpu_custom_call.1
$region0: #{tpu_custom_call.1}
  #allocation0 [shape = 'u32[]', space=smem, size = 0x4, offset = 0x4, fixed_abs, tag = 'smem constant byte address 0x4 - core index']
  #allocation1 [shape = 'u32[72,128]{1,0:T(1,128)}', space=vmem, size = 0x9000, scoped, tag = 'internal scratch']
  %s0 = inlined_call_operand.vmem [shape: f32[64,16], index: 0, kind: input, shape index: {}]
  %s1 = inlined_call_operand.vmem [shape: f32[16,128], index: 1, kind: input, shape index: {}]
  %s2 = inlined_call_operand.vmem [shape: f32[32,128], index: 2, kind: input, shape index: {}]
  %s3 = inlined_call_operand.vmem [shape: f32[1,128], index: 3, kind: input, shape index: {}]
  %s4 = inlined_call_operand.vmem [shape: f32[32,128], index: 4, kind: input, shape index: {}]
  %s5 = inlined_call_operand.vmem [shape: f32[1,128], index: 5, kind: input, shape index: {}]
  %s6 = inlined_call_operand.hbm [shape: f32[8,128], index: 6, kind: output, shape index: {}]
  %s7 = sld [smem:[#allocation0]]
  $region34: #{tpu_custom_call.1} parent=0
    _
  %s9 = ssub.s32 1, %s7
  %s10 = scalar_select 0, %s9, %s7
  $region1: #{tpu_custom_call.1} parent=0
    #allocation2 [shape = 'u8[4096]{0}', space=vmem, size = 0x1000, scoped, tag = 'output window, operand 0, single buffered']
    #allocation3 [shape = 's32[1]{0}', space=sflag, size = 0x4, scoped, tag = 'scoped memory for tpu_custom_call.1']
    %11 = vsyncpa [#allocation3], 0
    // Predicated region
    $region2: #{tpu_custom_call.1} parent=1 // pred_check
      _
    $region3: #{tpu_custom_call.1} parent=1 // pred_check_branch
      %13 = sbr.rel (0) target = $region5
    $region4: #{tpu_custom_call.1} parent=1 // pred_region
      _
    $region5: #{tpu_custom_call.1} parent=1 // pred_fallthru
      _
    // Predicated region
    $region6: #{tpu_custom_call.1} parent=1 // pred_check
      _
    $region7: #{tpu_custom_call.1} parent=1 // pred_check_branch
      %15 = sbr.rel (0) target = $region9
    $region8: #{tpu_custom_call.1} parent=1 // pred_region
      _
    $region9: #{tpu_custom_call.1} parent=1 // pred_fallthru
      _
    // Predicated region
    $region10: #{tpu_custom_call.1} parent=1 // pred_check
      _
    $region11: #{tpu_custom_call.1} parent=1 // pred_check_branch
      %17 = sbr.rel (0) target = $region13
    $region12: #{tpu_custom_call.1} parent=1 // pred_region
      _
    $region13: #{tpu_custom_call.1} parent=1 // pred_fallthru
      _
    // Predicated region
    $region14: #{tpu_custom_call.1} parent=1 // pred_check
      _
    $region15: #{tpu_custom_call.1} parent=1 // pred_check_branch
      %19 = sbr.rel (0) target = $region17
    $region16: #{tpu_custom_call.1} parent=1 // pred_region
      _
    $region17: #{tpu_custom_call.1} parent=1 // pred_fallthru
      _
    // Predicated region
    $region18: #{tpu_custom_call.1} parent=1 // pred_check
      _
    $region19: #{tpu_custom_call.1} parent=1 // pred_check_branch
      %21 = sbr.rel (0) target = $region21
    $region20: #{tpu_custom_call.1} parent=1 // pred_region
      _
    $region21: #{tpu_custom_call.1} parent=1 // pred_fallthru
      _
    // Predicated region
    $region22: #{tpu_custom_call.1} parent=1 // pred_check
      _
    $region23: #{tpu_custom_call.1} parent=1 // pred_check_branch
      %23 = sbr.rel (0) target = $region25
    $region24: #{tpu_custom_call.1} parent=1 // pred_region
      _
    $region25: #{tpu_custom_call.1} parent=1 // pred_fallthru
      _
    %v24 = vld [vmem:[%s0] sm:$0xff]
    %v25 = vld [vmem:[%s0 + $0x8] sm:$0xff]
    %v26 = vld [vmem:[%s0 + $0x10] sm:$0xff]
    %v27 = vld [vmem:[%s0 + $0x18] sm:$0xff]
    %v28 = vld [vmem:[%s0 + $0x20] sm:$0xff]
    %v29 = vld [vmem:[%s0 + $0x28] sm:$0xff]
    %v30 = vld [vmem:[%s0 + $0x30] sm:$0xff]
    %v31 = vld [vmem:[%s0 + $0x38] sm:$0xff]
    %v32 = vld [vmem:[%s1] sm:$0xff]
    %v33 = vld [vmem:[%s1 + $0x8] sm:$0xff]
    %v34 = vld [vmem:[%s3] sm:$0x1]
    %v36 = vperm.slane %v34, 0
    %vm38 = vcmask 130048
    %v40 = vsel %vm38, %v24, 0
    %v43 = vsel %vm38, %v25, 0
    %v46 = vsel %vm38, %v26, 0
    %v49 = vsel %vm38, %v27, 0
    %v52 = vsel %vm38, %v28, 0
    %v55 = vsel %vm38, %v29, 0
    %v58 = vsel %vm38, %v30, 0
    %v61 = vsel %vm38, %v31, 0
    %63 = vmatpush.msra.mxu0 0.0
    %64 = vmatpush.msra.mxu0 0.0
    %65 = vmatpush.msra.mxu0 0.0
    %66 = vmatpush.msra.mxu0 0.0
    %67 = vmatpush.msra.mxu0 0.0
    %68 = vmatpush.msra.mxu0 0.0
    %69 = vmatpush.msra.mxu0 0.0
    %70 = vmatpush.msra.mxu0 0.0
    %71 = vmatpush.msra.mxu0 0.0
    %72 = vmatpush.msra.mxu0 0.0
    %73 = vmatpush.msra.mxu0 0.0
    %74 = vmatpush.msra.mxu0 0.0
    %75 = vmatpush.msra.mxu0 0.0
    %76 = vmatpush.msra.mxu0 0.0
    %77 = vmatpush.msra.mxu0 %v33
    %78 = vmatpush.msra.mxu0 %v32
    %79 = vmatmul.f32.gmra.mxu0 %v40
    %v80 = vpop.f32.mrf.mxu0
    %v81 = vadd.f32 %v36, %v80
    %82 = vmatmul.f32.gmra.mxu0 %v43
    %v83 = vpop.f32.mrf.mxu0
    %v84 = vadd.f32 %v36, %v83
    %85 = vmatmul.f32.gmra.mxu0 %v46
    %v86 = vpop.f32.mrf.mxu0
    %v87 = vadd.f32 %v36, %v86
    %88 = vmatmul.f32.gmra.mxu0 %v49
    %v89 = vpop.f32.mrf.mxu0
    %v90 = vadd.f32 %v36, %v89
    %91 = vmatmul.f32.gmra.mxu0 %v52
    %v92 = vpop.f32.mrf.mxu0
    %v93 = vadd.f32 %v36, %v92
    %94 = vmatmul.f32.gmra.mxu0 %v55
    %v95 = vpop.f32.mrf.mxu0
    %v96 = vadd.f32 %v36, %v95
    %97 = vmatmul.f32.gmra.mxu0 %v58
    %v98 = vpop.f32.mrf.mxu0
    %v99 = vadd.f32 %v36, %v98
    %100 = vmatmul.f32.gmra.mxu0 %v61
    %v101 = vpop.f32.mrf.mxu0
    %v102 = vadd.f32 %v36, %v101
    %103 = vdwg.mxu0
    %v104 = vld [vmem:[%s2] sm:$0xff]
    %v105 = vld [vmem:[%s2 + $0x8] sm:$0xff]
    %v106 = vld [vmem:[%s2 + $0x10] sm:$0xff]
    %v107 = vld [vmem:[%s2 + $0x18] sm:$0xff]
    %vm108 = vcmask 261120
    %v110 = vsel %vm108, 0.0, 0
    %112 = vmatpush.msra.mxu0 0.0
    %113 = vmatpush.msra.mxu0 0.0
    %114 = vmatpush.msra.mxu0 0.0
    %115 = vmatpush.msra.mxu0 0.0
    %116 = vmatpush.msra.mxu0 0.0
    %117 = vmatpush.msra.mxu0 0.0
    %118 = vmatpush.msra.mxu0 0.0
    %119 = vmatpush.msra.mxu0 0.0
    %120 = vmatpush.msra.mxu0 0.0
    %121 = vmatpush.msra.mxu0 0.0
    %122 = vmatpush.msra.mxu0 0.0
    %123 = vmatpush.msra.mxu0 0.0
    %124 = vmatpush.msra.mxu0 %v107
    %125 = vmatpush.msra.mxu0 %v106
    %126 = vmatpush.msra.mxu0 %v105
    %127 = vmatpush.msra.mxu0 %v104
    %128 = vmatmul.f32.gmra.mxu0 %v110
    %v129 = vpop.f32.mrf.mxu0
    %v130 = vadd.f32 0.0, %v129
    %131 = vdwg.mxu0
    %v132 = vadd.f32 %v81, %v130
    %v133 = vxor.u32 %v132, 2147483648
    %v134 = vmul.f32 %v133, 1.442695
    %v135 = vpow.pop %v134
    %v136 = vadd.f32 %v135, 1.0
    %v137 = vrcp.pop %v136
    %v138 = vmul.f32 %v136, %v137
    %v139 = vsub.f32 1.0, %v138
    %v140 = vmul.f32 %v137, %v139
    %v141 = vadd.f32 %v137, %v140
    %vm142 = vweird.f32 %v136
    %vm143 = vweird.f32 %v137
    %vm144 = vmor %vm142, %vm143
    %v145 = vsel %vm144, %v137, %v141
    %v146 = vand.u32 2147483647, %v136
    %vm147 = vcmp.eq.f32.partialorder %v146, 8.507059e+37
    %v148 = vand.u32 %v136, 2147483648
    %v149 = vor.u32 1.1754944e-38, %v148
    %v150 = vsel %vm147, %v149, %v145
    %v151 = vmul.f32 1.0, %v150
    %v152 = vtanh.pop %v132
    %v153 = vmul.f32 %v151, 0.0
    %155 = vrot.lane.b32.xlu0 %v152, 64
    %v156 = vpop.permute.xlu0 %155
    %v158 = vmul.f32 %v151, %v156
    %160 = vrot.lane.b32.xlu0 %v158, 32
    %v161 = vpop.permute.xlu0 %160
    %v163 = vadd.f32 %v153, %v161
    %v164 = vtanh.pop %v163
    %166 = vrot.lane.b32.xlu0 %v164, 64
    %v167 = vpop.permute.xlu0 %166
    %v169 = vmul.f32 %v151, %v167
    %171 = vrot.lane.b32.xlu0 %v169, 32
    %v172 = vpop.permute.xlu0 %171
    %v173 = vsel %vm108, %v172, 0
    %175 = vmatpush.msra.mxu0 0.0
    %176 = vmatpush.msra.mxu0 0.0
    %177 = vmatpush.msra.mxu0 0.0
    %178 = vmatpush.msra.mxu0 0.0
    %179 = vmatpush.msra.mxu0 0.0
    %180 = vmatpush.msra.mxu0 0.0
    %181 = vmatpush.msra.mxu0 0.0
    %182 = vmatpush.msra.mxu0 0.0
    %183 = vmatpush.msra.mxu0 0.0
    %184 = vmatpush.msra.mxu0 0.0
    %185 = vmatpush.msra.mxu0 0.0
    %186 = vmatpush.msra.mxu0 0.0
    %187 = vmatpush.msra.mxu0 %v107
    %188 = vmatpush.msra.mxu0 %v106
    %189 = vmatpush.msra.mxu0 %v105
    %190 = vmatpush.msra.mxu0 %v104
    %191 = vmatmul.f32.gmra.mxu0 %v173
    %v192 = vpop.f32.mrf.mxu0
    %v193 = vadd.f32 0.0, %v192
    %194 = vdwg.mxu0
    %v195 = vadd.f32 %v84, %v193
    %v196 = vxor.u32 %v195, 2147483648
    %v197 = vmul.f32 %v196, 1.442695
    %v198 = vpow.pop %v197
    %v199 = vadd.f32 %v198, 1.0
    %v200 = vrcp.pop %v199
    %v201 = vmul.f32 %v199, %v200
    %v202 = vsub.f32 1.0, %v201
    %v203 = vmul.f32 %v200, %v202
    %v204 = vadd.f32 %v200, %v203
    %vm205 = vweird.f32 %v199
    %vm206 = vweird.f32 %v200
    %vm207 = vmor %vm205, %vm206
    %v208 = vsel %vm207, %v200, %v204
    %v209 = vand.u32 2147483647, %v199
    %vm210 = vcmp.eq.f32.partialorder %v209, 8.507059e+37
    %v211 = vand.u32 %v199, 2147483648
    %v212 = vor.u32 1.1754944e-38, %v211
    %v213 = vsel %vm210, %v212, %v208
    %v214 = vmul.f32 1.0, %v213
    %v215 = vtanh.pop %v195
    %v216 = vmul.f32 %v214, %v163
    %218 = vrot.lane.b32.xlu0 %v215, 64
    %v219 = vpop.permute.xlu0 %218
    %v221 = vmul.f32 %v214, %v219
    %223 = vrot.lane.b32.xlu0 %v221, 32
    %v224 = vpop.permute.xlu0 %223
    %v226 = vadd.f32 %v216, %v224
    %v227 = vtanh.pop %v226
    %229 = vrot.lane.b32.xlu0 %v227, 64
    %v230 = vpop.permute.xlu0 %229
    %v232 = vmul.f32 %v214, %v230
    %234 = vrot.lane.b32.xlu0 %v232, 32
    %v235 = vpop.permute.xlu0 %234
    %v236 = vsel %vm108, %v235, 0
    %238 = vmatpush.msra.mxu0 0.0
    %239 = vmatpush.msra.mxu0 0.0
    %240 = vmatpush.msra.mxu0 0.0
    %241 = vmatpush.msra.mxu0 0.0
    %242 = vmatpush.msra.mxu0 0.0
    %243 = vmatpush.msra.mxu0 0.0
    %244 = vmatpush.msra.mxu0 0.0
    %245 = vmatpush.msra.mxu0 0.0
    %246 = vmatpush.msra.mxu0 0.0
    %247 = vmatpush.msra.mxu0 0.0
    %248 = vmatpush.msra.mxu0 0.0
    %249 = vmatpush.msra.mxu0 0.0
    %250 = vmatpush.msra.mxu0 %v107
    %251 = vmatpush.msra.mxu0 %v106
    %252 = vmatpush.msra.mxu0 %v105
    %253 = vmatpush.msra.mxu0 %v104
    %254 = vmatmul.f32.gmra.mxu0 %v236
    %v255 = vpop.f32.mrf.mxu0
    %v256 = vadd.f32 0.0, %v255
    %257 = vdwg.mxu0
    %v258 = vadd.f32 %v87, %v256
    %v259 = vxor.u32 %v258, 2147483648
    %v260 = vmul.f32 %v259, 1.442695
    %v261 = vpow.pop %v260
    %v262 = vadd.f32 %v261, 1.0
    %v263 = vrcp.pop %v262
    %v264 = vmul.f32 %v262, %v263
    %v265 = vsub.f32 1.0, %v264
    %v266 = vmul.f32 %v263, %v265
    %v267 = vadd.f32 %v263, %v266
    %vm268 = vweird.f32 %v262
    %vm269 = vweird.f32 %v263
    %vm270 = vmor %vm268, %vm269
    %v271 = vsel %vm270, %v263, %v267
    %v272 = vand.u32 2147483647, %v262
    %vm273 = vcmp.eq.f32.partialorder %v272, 8.507059e+37
    %v274 = vand.u32 %v262, 2147483648
    %v275 = vor.u32 1.1754944e-38, %v274
    %v276 = vsel %vm273, %v275, %v271
    %v277 = vmul.f32 1.0, %v276
    %v278 = vtanh.pop %v258
    %v279 = vmul.f32 %v277, %v226
    %281 = vrot.lane.b32.xlu0 %v278, 64
    %v282 = vpop.permute.xlu0 %281
    %v284 = vmul.f32 %v277, %v282
    %286 = vrot.lane.b32.xlu0 %v284, 32
    %v287 = vpop.permute.xlu0 %286
    %v289 = vadd.f32 %v279, %v287
    %v290 = vtanh.pop %v289
    %292 = vrot.lane.b32.xlu0 %v290, 64
    %v293 = vpop.permute.xlu0 %292
    %v295 = vmul.f32 %v277, %v293
    %297 = vrot.lane.b32.xlu0 %v295, 32
    %v298 = vpop.permute.xlu0 %297
    %v299 = vsel %vm108, %v298, 0
    %301 = vmatpush.msra.mxu0 0.0
    %302 = vmatpush.msra.mxu0 0.0
    %303 = vmatpush.msra.mxu0 0.0
    %304 = vmatpush.msra.mxu0 0.0
    %305 = vmatpush.msra.mxu0 0.0
    %306 = vmatpush.msra.mxu0 0.0
    %307 = vmatpush.msra.mxu0 0.0
    %308 = vmatpush.msra.mxu0 0.0
    %309 = vmatpush.msra.mxu0 0.0
    %310 = vmatpush.msra.mxu0 0.0
    %311 = vmatpush.msra.mxu0 0.0
    %312 = vmatpush.msra.mxu0 0.0
    %313 = vmatpush.msra.mxu0 %v107
    %314 = vmatpush.msra.mxu0 %v106
    %315 = vmatpush.msra.mxu0 %v105
    %316 = vmatpush.msra.mxu0 %v104
    %317 = vmatmul.f32.gmra.mxu0 %v299
    %v318 = vpop.f32.mrf.mxu0
    %v319 = vadd.f32 0.0, %v318
    %320 = vdwg.mxu0
    %v321 = vadd.f32 %v90, %v319
    %v322 = vxor.u32 %v321, 2147483648
    %v323 = vmul.f32 %v322, 1.442695
    %v324 = vpow.pop %v323
    %v325 = vadd.f32 %v324, 1.0
    %v326 = vrcp.pop %v325
    %v327 = vmul.f32 %v325, %v326
    %v328 = vsub.f32 1.0, %v327
    %v329 = vmul.f32 %v326, %v328
    %v330 = vadd.f32 %v326, %v329
    %vm331 = vweird.f32 %v325
    %vm332 = vweird.f32 %v326
    %vm333 = vmor %vm331, %vm332
    %v334 = vsel %vm333, %v326, %v330
    %v335 = vand.u32 2147483647, %v325
    %vm336 = vcmp.eq.f32.partialorder %v335, 8.507059e+37
    %v337 = vand.u32 %v325, 2147483648
    %v338 = vor.u32 1.1754944e-38, %v337
    %v339 = vsel %vm336, %v338, %v334
    %v340 = vmul.f32 1.0, %v339
    %v341 = vtanh.pop %v321
    %v342 = vmul.f32 %v340, %v289
    %344 = vrot.lane.b32.xlu0 %v341, 64
    %v345 = vpop.permute.xlu0 %344
    %v347 = vmul.f32 %v340, %v345
    %349 = vrot.lane.b32.xlu0 %v347, 32
    %v350 = vpop.permute.xlu0 %349
    %v352 = vadd.f32 %v342, %v350
    %v353 = vtanh.pop %v352
    %355 = vrot.lane.b32.xlu0 %v353, 64
    %v356 = vpop.permute.xlu0 %355
    %v358 = vmul.f32 %v340, %v356
    %360 = vrot.lane.b32.xlu0 %v358, 32
    %v361 = vpop.permute.xlu0 %360
    %v362 = vsel %vm108, %v361, 0
    %364 = vmatpush.msra.mxu0 0.0
    %365 = vmatpush.msra.mxu0 0.0
    %366 = vmatpush.msra.mxu0 0.0
    %367 = vmatpush.msra.mxu0 0.0
    %368 = vmatpush.msra.mxu0 0.0
    %369 = vmatpush.msra.mxu0 0.0
    %370 = vmatpush.msra.mxu0 0.0
    %371 = vmatpush.msra.mxu0 0.0
    %372 = vmatpush.msra.mxu0 0.0
    %373 = vmatpush.msra.mxu0 0.0
    %374 = vmatpush.msra.mxu0 0.0
    %375 = vmatpush.msra.mxu0 0.0
    %376 = vmatpush.msra.mxu0 %v107
    %377 = vmatpush.msra.mxu0 %v106
    %378 = vmatpush.msra.mxu0 %v105
    %379 = vmatpush.msra.mxu0 %v104
    %380 = vmatmul.f32.gmra.mxu0 %v362
    %v381 = vpop.f32.mrf.mxu0
    %v382 = vadd.f32 0.0, %v381
    %383 = vdwg.mxu0
    %v384 = vadd.f32 %v93, %v382
    %v385 = vxor.u32 %v384, 2147483648
    %v386 = vmul.f32 %v385, 1.442695
    %v387 = vpow.pop %v386
    %v388 = vadd.f32 %v387, 1.0
    %v389 = vrcp.pop %v388
    %v390 = vmul.f32 %v388, %v389
    %v391 = vsub.f32 1.0, %v390
    %v392 = vmul.f32 %v389, %v391
    %v393 = vadd.f32 %v389, %v392
    %vm394 = vweird.f32 %v388
    %vm395 = vweird.f32 %v389
    %vm396 = vmor %vm394, %vm395
    %v397 = vsel %vm396, %v389, %v393
    %v398 = vand.u32 2147483647, %v388
    %vm399 = vcmp.eq.f32.partialorder %v398, 8.507059e+37
    %v400 = vand.u32 %v388, 2147483648
    %v401 = vor.u32 1.1754944e-38, %v400
    %v402 = vsel %vm399, %v401, %v397
    %v403 = vmul.f32 1.0, %v402
    %v404 = vtanh.pop %v384
    %v405 = vmul.f32 %v403, %v352
    %407 = vrot.lane.b32.xlu0 %v404, 64
    %v408 = vpop.permute.xlu0 %407
    %v410 = vmul.f32 %v403, %v408
    %412 = vrot.lane.b32.xlu0 %v410, 32
    %v413 = vpop.permute.xlu0 %412
    %v415 = vadd.f32 %v405, %v413
    %v416 = vtanh.pop %v415
    %418 = vrot.lane.b32.xlu0 %v416, 64
    %v419 = vpop.permute.xlu0 %418
    %v421 = vmul.f32 %v403, %v419
    %423 = vrot.lane.b32.xlu0 %v421, 32
    %v424 = vpop.permute.xlu0 %423
    %v425 = vsel %vm108, %v424, 0
    %427 = vmatpush.msra.mxu0 0.0
    %428 = vmatpush.msra.mxu0 0.0
    %429 = vmatpush.msra.mxu0 0.0
    %430 = vmatpush.msra.mxu0 0.0
    %431 = vmatpush.msra.mxu0 0.0
    %432 = vmatpush.msra.mxu0 0.0
    %433 = vmatpush.msra.mxu0 0.0
    %434 = vmatpush.msra.mxu0 0.0
    %435 = vmatpush.msra.mxu0 0.0
    %436 = vmatpush.msra.mxu0 0.0
    %437 = vmatpush.msra.mxu0 0.0
    %438 = vmatpush.msra.mxu0 0.0
    %439 = vmatpush.msra.mxu0 %v107
    %440 = vmatpush.msra.mxu0 %v106
    %441 = vmatpush.msra.mxu0 %v105
    %442 = vmatpush.msra.mxu0 %v104
    %443 = vmatmul.f32.gmra.mxu0 %v425
    %v444 = vpop.f32.mrf.mxu0
    %v445 = vadd.f32 0.0, %v444
    %446 = vdwg.mxu0
    %v447 = vadd.f32 %v96, %v445
    %v448 = vxor.u32 %v447, 2147483648
    %v449 = vmul.f32 %v448, 1.442695
    %v450 = vpow.pop %v449
    %v451 = vadd.f32 %v450, 1.0
    %v452 = vrcp.pop %v451
    %v453 = vmul.f32 %v451, %v452
    %v454 = vsub.f32 1.0, %v453
    %v455 = vmul.f32 %v452, %v454
    %v456 = vadd.f32 %v452, %v455
    %vm457 = vweird.f32 %v451
    %vm458 = vweird.f32 %v452
    %vm459 = vmor %vm457, %vm458
    %v460 = vsel %vm459, %v452, %v456
    %v461 = vand.u32 2147483647, %v451
    %vm462 = vcmp.eq.f32.partialorder %v461, 8.507059e+37
    %v463 = vand.u32 %v451, 2147483648
    %v464 = vor.u32 1.1754944e-38, %v463
    %v465 = vsel %vm462, %v464, %v460
    %v466 = vmul.f32 1.0, %v465
    %v467 = vtanh.pop %v447
    %v468 = vmul.f32 %v466, %v415
    %470 = vrot.lane.b32.xlu0 %v467, 64
    %v471 = vpop.permute.xlu0 %470
    %v473 = vmul.f32 %v466, %v471
    %475 = vrot.lane.b32.xlu0 %v473, 32
    %v476 = vpop.permute.xlu0 %475
    %v478 = vadd.f32 %v468, %v476
    %v479 = vtanh.pop %v478
    %481 = vrot.lane.b32.xlu0 %v479, 64
    %v482 = vpop.permute.xlu0 %481
    %v484 = vmul.f32 %v466, %v482
    %486 = vrot.lane.b32.xlu0 %v484, 32
    %v487 = vpop.permute.xlu0 %486
    %v488 = vsel %vm108, %v487, 0
    %490 = vmatpush.msra.mxu0 0.0
    %491 = vmatpush.msra.mxu0 0.0
    %492 = vmatpush.msra.mxu0 0.0
    %493 = vmatpush.msra.mxu0 0.0
    %494 = vmatpush.msra.mxu0 0.0
    %495 = vmatpush.msra.mxu0 0.0
    %496 = vmatpush.msra.mxu0 0.0
    %497 = vmatpush.msra.mxu0 0.0
    %498 = vmatpush.msra.mxu0 0.0
    %499 = vmatpush.msra.mxu0 0.0
    %500 = vmatpush.msra.mxu0 0.0
    %501 = vmatpush.msra.mxu0 0.0
    %502 = vmatpush.msra.mxu0 %v107
    %503 = vmatpush.msra.mxu0 %v106
    %504 = vmatpush.msra.mxu0 %v105
    %505 = vmatpush.msra.mxu0 %v104
    %506 = vmatmul.f32.gmra.mxu0 %v488
    %v507 = vpop.f32.mrf.mxu0
    %v508 = vadd.f32 0.0, %v507
    %509 = vdwg.mxu0
    %v510 = vadd.f32 %v99, %v508
    %v511 = vxor.u32 %v510, 2147483648
    %v512 = vmul.f32 %v511, 1.442695
    %v513 = vpow.pop %v512
    %v514 = vadd.f32 %v513, 1.0
    %v515 = vrcp.pop %v514
    %v516 = vmul.f32 %v514, %v515
    %v517 = vsub.f32 1.0, %v516
    %v518 = vmul.f32 %v515, %v517
    %v519 = vadd.f32 %v515, %v518
    %vm520 = vweird.f32 %v514
    %vm521 = vweird.f32 %v515
    %vm522 = vmor %vm520, %vm521
    %v523 = vsel %vm522, %v515, %v519
    %v524 = vand.u32 2147483647, %v514
    %vm525 = vcmp.eq.f32.partialorder %v524, 8.507059e+37
    %v526 = vand.u32 %v514, 2147483648
    %v527 = vor.u32 1.1754944e-38, %v526
    %v528 = vsel %vm525, %v527, %v523
    %v529 = vmul.f32 1.0, %v528
    %v530 = vtanh.pop %v510
    %v531 = vmul.f32 %v529, %v478
    %533 = vrot.lane.b32.xlu0 %v530, 64
    %v534 = vpop.permute.xlu0 %533
    %v536 = vmul.f32 %v529, %v534
    %538 = vrot.lane.b32.xlu0 %v536, 32
    %v539 = vpop.permute.xlu0 %538
    %v541 = vadd.f32 %v531, %v539
    %v542 = vtanh.pop %v541
    %544 = vrot.lane.b32.xlu0 %v542, 64
    %v545 = vpop.permute.xlu0 %544
    %v547 = vmul.f32 %v529, %v545
    %549 = vrot.lane.b32.xlu0 %v547, 32
    %v550 = vpop.permute.xlu0 %549
    %v551 = vsel %vm108, %v550, 0
    %553 = vmatpush.msra.mxu0 0.0
    %554 = vmatpush.msra.mxu0 0.0
    %555 = vmatpush.msra.mxu0 0.0
    %556 = vmatpush.msra.mxu0 0.0
    %557 = vmatpush.msra.mxu0 0.0
    %558 = vmatpush.msra.mxu0 0.0
    %559 = vmatpush.msra.mxu0 0.0
    %560 = vmatpush.msra.mxu0 0.0
    %561 = vmatpush.msra.mxu0 0.0
    %562 = vmatpush.msra.mxu0 0.0
    %563 = vmatpush.msra.mxu0 0.0
    %564 = vmatpush.msra.mxu0 0.0
    %565 = vmatpush.msra.mxu0 %v107
    %566 = vmatpush.msra.mxu0 %v106
    %567 = vmatpush.msra.mxu0 %v105
    %568 = vmatpush.msra.mxu0 %v104
    %569 = vmatmul.f32.gmra.mxu0 %v551
    %v570 = vpop.f32.mrf.mxu0
    %v571 = vadd.f32 0.0, %v570
    %572 = vdwg.mxu0
    %v573 = vadd.f32 %v102, %v571
    %v574 = vxor.u32 %v573, 2147483648
    %v575 = vmul.f32 %v574, 1.442695
    %v576 = vpow.pop %v575
    %v577 = vadd.f32 %v576, 1.0
    %v578 = vrcp.pop %v577
    %v579 = vmul.f32 %v577, %v578
    %v580 = vsub.f32 1.0, %v579
    %v581 = vmul.f32 %v578, %v580
    %v582 = vadd.f32 %v578, %v581
    %vm583 = vweird.f32 %v577
    %vm584 = vweird.f32 %v578
    %vm585 = vmor %vm583, %vm584
    %v586 = vsel %vm585, %v578, %v582
    %v587 = vand.u32 2147483647, %v577
    %vm588 = vcmp.eq.f32.partialorder %v587, 8.507059e+37
    %v589 = vand.u32 %v577, 2147483648
    %v590 = vor.u32 1.1754944e-38, %v589
    %v591 = vsel %vm588, %v590, %v586
    %v592 = vmul.f32 1.0, %v591
    %v593 = vtanh.pop %v573
    %v594 = vmul.f32 %v592, %v541
    %596 = vrot.lane.b32.xlu0 %v593, 64
    %v597 = vpop.permute.xlu0 %596
    %v599 = vmul.f32 %v592, %v597
    %601 = vrot.lane.b32.xlu0 %v599, 32
    %v602 = vpop.permute.xlu0 %601
    %v604 = vadd.f32 %v594, %v602
    %v605 = vtanh.pop %v604
    %607 = vrot.lane.b32.xlu0 %v605, 64
    %v608 = vpop.permute.xlu0 %607
    %v610 = vmul.f32 %v592, %v608
    %v611 = vld [vmem:[%s4] sm:$0xff]
    %v612 = vld [vmem:[%s4 + $0x8] sm:$0xff]
    %v613 = vld [vmem:[%s4 + $0x10] sm:$0xff]
    %v614 = vld [vmem:[%s4 + $0x18] sm:$0xff]
    %v615 = vld [vmem:[%s5] sm:$0x1]
    %v617 = vperm.slane %v615, 0
    %620 = vrot.lane.b32.xlu0 %v610, 32
    %v621 = vpop.permute.xlu0 %620
    %v622 = vsel %vm108, %v621, 0
    %624 = vmatpush.msra.mxu0 0.0
    %625 = vmatpush.msra.mxu0 0.0
    %626 = vmatpush.msra.mxu0 0.0
    %627 = vmatpush.msra.mxu0 0.0
    %628 = vmatpush.msra.mxu0 0.0
    %629 = vmatpush.msra.mxu0 0.0
    %630 = vmatpush.msra.mxu0 0.0
    %631 = vmatpush.msra.mxu0 0.0
    %632 = vmatpush.msra.mxu0 0.0
    %633 = vmatpush.msra.mxu0 0.0
    %634 = vmatpush.msra.mxu0 0.0
    %635 = vmatpush.msra.mxu0 0.0
    %636 = vmatpush.msra.mxu0 %v614
    %637 = vmatpush.msra.mxu0 %v613
    %638 = vmatpush.msra.mxu0 %v612
    %639 = vmatpush.msra.mxu0 %v611
    %640 = vmatmul.f32.gmra.mxu0 %v622
    %v641 = vpop.f32.mrf.mxu0
    %v642 = vadd.f32 %v617, %v641
    %643 = vdwg.mxu0
    %v644 = vxor.u32 %v642, 2147483648
    %v645 = vmul.f32 %v644, 1.442695
    %v646 = vpow.pop %v645
    %v647 = vadd.f32 %v646, 1.0
    %v648 = vrcp.pop %v647
    %v649 = vmul.f32 %v647, %v648
    %v650 = vsub.f32 1.0, %v649
    %v651 = vmul.f32 %v648, %v650
    %v652 = vadd.f32 %v648, %v651
    %vm653 = vweird.f32 %v647
    %vm654 = vweird.f32 %v648
    %vm655 = vmor %vm653, %vm654
    %v656 = vsel %vm655, %v648, %v652
    %v657 = vand.u32 2147483647, %v647
    %vm658 = vcmp.eq.f32.partialorder %v657, 8.507059e+37
    %v659 = vand.u32 %v647, 2147483648
    %v660 = vor.u32 1.1754944e-38, %v659
    %v661 = vsel %vm658, %v660, %v656
    %v662 = vmul.f32 1.0, %v661
    %663 = vst [vmem:[#allocation2] sm:$0xff] %v662
    // Predicated region
    $region26: #{tpu_custom_call.1} parent=1 // pred_check
      _
    $region27: #{tpu_custom_call.1} parent=1 // pred_check_branch
      %665 = sbr.rel (0) target = $region29
    $region28: #{tpu_custom_call.1} parent=1 // pred_region
      %667 = vsyncadd [#allocation3], 0
      %s669 = sshll.u32 [#allocation2], 4
      %s670 = int_to_ptr.vmem [resolvable:$true] %s669
      %s671 = sshll.u32 %s6, 4
      %s672 = int_to_ptr.hbm [resolvable:$true] %s671
      %674 = dma.vmem_to_hbm [thread:$0]  %s670, 128, %s672, [#allocation3]
    $region29: #{tpu_custom_call.1} parent=1 // pred_fallthru
      _
    // Predicated region
    $region30: #{tpu_custom_call.1} parent=1 // pred_check
      _
    $region31: #{tpu_custom_call.1} parent=1 // pred_check_branch
      %676 = sbr.rel (0) target = $region33
    $region32: #{tpu_custom_call.1} parent=1 // pred_region
      %678 = dma.done [#allocation3], 128
    $region33: #{tpu_custom_call.1} parent=1 // pred_fallthru
      _
    %679 = vsyncpa [#allocation3], 1

</llo_original>
